<compile_context>
chip_gen: v7x
topology: tpu7x:2x2x1
jax: 0.10.0
libtpu: 0.0.40
codegen_flags: <defaults>
</compile_context>

<pallas_src>
import jax
import jax.numpy as jnp
from jax.experimental import pallas as pl
from jax.experimental.pallas import tpu as pltpu

NUM_CLASSES = 8
PRED_D = 5 + NUM_CLASSES     # [obj, x, y, w, h, class logits...]
TGT_D = 6                    # [obj, x, y, w, h, class index]
LANE = 128
MAX_TILE_R = 64              # up to 64 * 128 = 8192 rows per grid step

# slot order in the per-anchor partial-sum output
S_NOOBJ, C_NOOBJ, S_OBJ, C_OBJ, S_BOX, S_CLS = range(6)


def yolo_loss_kernel(pred_ref, targ_ref, anc_ref, out_ref,
                     s_no, c_no, s_ob, c_ob, s_bx, s_cl):
    i = pl.program_id(1)

    @pl.when(i == 0)
    def _init():
        z = jnp.zeros_like(s_no)
        s_no[...] = z; c_no[...] = z
        s_ob[...] = z; c_ob[...] = z
        s_bx[...] = z; s_cl[...] = z

    # ---- masks (padding rows carry t0 == -1 -> excluded from both) -------
    t0 = targ_ref[0]                               # (TILE_R, 128)
    obj_f = (t0 == 1.0).astype(jnp.float32)
    noobj_f = (t0 == 0.0).astype(jnp.float32)

    # ---- no-object loss: stable BCE-with-logits on objectness ------------
    # target is 0 on every row selected by noobj_f, so the -p0*t0 term of the
    # stable BCE form is identically zero after masking and is dropped.
    p0 = pred_ref[0]
    e0 = jnp.exp(-jnp.abs(p0))
    bce = jnp.maximum(p0, 0.0) + jnp.log(1.0 + e0)
    s_no[...] += bce * noobj_f
    c_no[...] += noobj_f

    # ---- sigmoids via tanh: one full-precision EUP op each ---------------
    sig0 = 0.5 * jnp.tanh(0.5 * p0) + 0.5
    sx = 0.5 * jnp.tanh(0.5 * pred_ref[1]) + 0.5
    sy = 0.5 * jnp.tanh(0.5 * pred_ref[2]) + 0.5
    pw = pred_ref[3]
    ph = pred_ref[4]

    aw = anc_ref[0:1, :]       # (1,128) broadcast over sublanes
    ah = anc_ref[1:2, :]
    iaw = anc_ref[2:3, :]      # 1 / anchor_w  (precomputed in wrapper)
    iah = anc_ref[3:4, :]
    bw = jnp.exp(pw) * aw
    bh = jnp.exp(ph) * ah

    tx = targ_ref[1]; ty = targ_ref[2]; tw = targ_ref[3]; th = targ_ref[4]

    # ---- midpoint-format IoU ---------------------------------------------
    iw = jnp.maximum(jnp.minimum(sx + 0.5 * bw, tx + 0.5 * tw)
                     - jnp.maximum(sx - 0.5 * bw, tx - 0.5 * tw), 0.0)
    ih = jnp.maximum(jnp.minimum(sy + 0.5 * bh, ty + 0.5 * th)
                     - jnp.maximum(sy - 0.5 * bh, ty - 0.5 * th), 0.0)
    inter = iw * ih
    union = jnp.abs(bw * bh) + jnp.abs(tw * th) - inter + 1e-6
    iou = inter * pl.reciprocal(union, approx=True)

    # ---- object loss: MSE(sigmoid(p0), iou * t0) over obj rows ------------
    obj_sq = (sig0 - iou * t0) ** 2
    s_ob[...] += obj_sq * obj_f
    c_ob[...] += obj_f

    # ---- box loss: MSE over 4 channels (target w,h -> log space) ----------
    twl = jnp.log(1e-6 + tw * iaw)
    thl = jnp.log(1e-6 + th * iah)
    box_sq = ((sx - tx) ** 2 + (sy - ty) ** 2
              + (pw - twl) ** 2 + (ph - thl) ** 2)
    s_bx[...] += box_sq * obj_f

    # ---- class loss: cross entropy over the last NUM_CLASSES channels -----
    logits = [pred_ref[5 + c] for c in range(NUM_CLASSES)]
    m = logits[0]
    for c in range(1, NUM_CLASSES):
        m = jnp.maximum(m, logits[c])
    cls = targ_ref[5]
    se = jnp.zeros_like(m)
    picked = jnp.zeros_like(m)
    for c in range(NUM_CLASSES):
        se += jnp.exp(logits[c] - m)
        picked += jnp.where(cls == float(c), logits[c], 0.0)
    ce = m + jnp.log(se) - picked
    s_cl[...] += ce * obj_f

    # ---- on this anchor's last tile: emit per-lane partial sums -----------
    @pl.when(i == pl.num_programs(1) - 1)
    def _final():
        out_ref[S_NOOBJ:S_NOOBJ + 1, :] = jnp.sum(s_no[...], axis=0, keepdims=True)
        out_ref[C_NOOBJ:C_NOOBJ + 1, :] = jnp.sum(c_no[...], axis=0, keepdims=True)
        out_ref[S_OBJ:S_OBJ + 1, :] = jnp.sum(s_ob[...], axis=0, keepdims=True)
        out_ref[C_OBJ:C_OBJ + 1, :] = jnp.sum(c_ob[...], axis=0, keepdims=True)
        out_ref[S_BOX:S_BOX + 1, :] = jnp.sum(s_bx[...], axis=0, keepdims=True)
        out_ref[S_CLS:S_CLS + 1, :] = jnp.sum(s_cl[...], axis=0, keepdims=True)


def yolo_loss(pred, target, anchors):
    B, A, S, S2, Dp = pred.shape
    Dt = target.shape[-1]
    M = B * S * S2                                   # rows per anchor

    # channel-major, anchor-major: (A, D, M)
    p3 = jnp.transpose(pred, (1, 4, 0, 2, 3)).reshape(A, Dp, M).astype(jnp.float32)
    t3 = jnp.transpose(target, (1, 4, 0, 2, 3)).reshape(A, Dt, M).astype(jnp.float32)

    # rows per grid step = tile_r sublanes x 128 lanes
    tile_r = min(MAX_TILE_R, pl.cdiv(M, LANE))
    rows_per_step = tile_r * LANE
    Mp = pl.cdiv(M, rows_per_step) * rows_per_step
    if Mp > M:
        pad = Mp - M
        p3 = jnp.pad(p3, ((0, 0), (0, 0), (0, pad)))
        # padded targets get objectness -1 -> counted in neither mask
        t_pad = jnp.concatenate(
            [jnp.full((A, 1, pad), -1.0, jnp.float32),
             jnp.zeros((A, Dt - 1, pad), jnp.float32)], axis=1)
        t3 = jnp.concatenate([t3, t_pad], axis=2)
    Rp = Mp // LANE
    p4 = p3.reshape(A, Dp, Rp, LANE)
    t4 = t3.reshape(A, Dt, Rp, LANE)

    # per-anchor constants broadcast over lanes: [w, h, 1/w, 1/h]
    anc = anchors.astype(jnp.float32)
    anc_tab = jnp.stack([anc[:, 0], anc[:, 1], 1.0 / anc[:, 0], 1.0 / anc[:, 1]],
                        axis=1)
    anc_tab = jnp.broadcast_to(anc_tab[:, :, None], (A, 4, LANE))

    parts = pl.pallas_call(
        yolo_loss_kernel,
        out_shape=jax.ShapeDtypeStruct((A, 6, LANE), jnp.float32),
        grid_spec=pltpu.PrefetchScalarGridSpec(
            num_scalar_prefetch=0,
            grid=(A, Rp // tile_r),
            in_specs=[
                pl.BlockSpec((None, Dp, tile_r, LANE), lambda a, i: (a, 0, i, 0)),
                pl.BlockSpec((None, Dt, tile_r, LANE), lambda a, i: (a, 0, i, 0)),
                pl.BlockSpec((None, 4, LANE), lambda a, i: (a, 0, 0)),
            ],
            out_specs=pl.BlockSpec((None, 6, LANE), lambda a, i: (a, 0, 0)),
            scratch_shapes=[pltpu.VMEM((tile_r, LANE), jnp.float32)] * 6,
        ),
        compiler_params=pltpu.CompilerParams(
            dimension_semantics=("parallel", "arbitrary")),
    )(p4, t4, anc_tab)

    tot = jnp.sum(parts, axis=(0, 2))                # (6,) totals over anchors+lanes
    n_obj = tot[C_OBJ]
    n_noobj = tot[C_NOOBJ]
    # NOTE: like the reference, divisions are unguarded; zero obj (or zero
    # no-obj) cells yields NaN in both implementations.
    return (tot[S_BOX] / (4.0 * n_obj)
            + tot[S_OBJ] / n_obj
            + tot[S_NOOBJ] / n_noobj
            + tot[S_CLS] / n_obj)


# ------------------------- pure-JAX reference ---------------------------- #
def _iou_ref(b1, b2):
    b1x1, b1x2 = b1[..., 0:1] - b1[..., 2:3] / 2, b1[..., 0:1] + b1[..., 2:3] / 2
    b1y1, b1y2 = b1[..., 1:2] - b1[..., 3:4] / 2, b1[..., 1:2] + b1[..., 3:4] / 2
    b2x1, b2x2 = b2[..., 0:1] - b2[..., 2:3] / 2, b2[..., 0:1] + b2[..., 2:3] / 2
    b2y1, b2y2 = b2[..., 1:2] - b2[..., 3:4] / 2, b2[..., 1:2] + b2[..., 3:4] / 2
    inter = (jnp.clip(jnp.minimum(b1x2, b2x2) - jnp.maximum(b1x1, b2x1), 0, None) *
             jnp.clip(jnp.minimum(b1y2, b2y2) - jnp.maximum(b1y1, b2y1), 0, None))
    a1 = jnp.abs((b1x2 - b1x1) * (b1y2 - b1y1))
    a2 = jnp.abs((b2x2 - b2x1) * (b2y2 - b2y1))
    return inter / (a1 + a2 - inter + 1e-6)


def reference_loss(pred, target, anchors):
    obj = target[..., 0] == 1
    noobj = target[..., 0] == 0
    p0 = pred[..., 0]
    bce = jnp.maximum(p0, 0) - p0 * target[..., 0] + jnp.log1p(jnp.exp(-jnp.abs(p0)))
    no_object_loss = bce[noobj].mean()

    anc = anchors.reshape(1, 3, 1, 1, 2)
    sxy = jax.nn.sigmoid(pred[..., 1:3])
    bwh = jnp.exp(pred[..., 3:5]) * anc
    box_preds = jnp.concatenate([sxy, bwh], axis=-1)
    ious = _iou_ref(box_preds[obj], target[..., 1:5][obj])
    object_loss = jnp.mean(
        (jax.nn.sigmoid(pred[..., 0:1][obj]) - ious * target[..., 0:1][obj]) ** 2)

    pred_box = jnp.concatenate([sxy, pred[..., 3:5]], axis=-1)
    t_box = jnp.concatenate([target[..., 1:3],
                             jnp.log(1e-6 + target[..., 3:5] / anc)], axis=-1)
    box_loss = jnp.mean((pred_box[obj] - t_box[obj]) ** 2)

    logits = pred[..., 5:][obj]
    labels = target[..., 5][obj].astype(jnp.int32)
    logp = jax.nn.log_softmax(logits, axis=-1)
    class_loss = -jnp.mean(jnp.take_along_axis(logp, labels[:, None], axis=-1))
    return box_loss + object_loss + no_object_loss + class_loss


if __name__ == "__main__":
    B, A, S, C = 2, 3, 8, NUM_CLASSES
    key = jax.random.PRNGKey(0)
    k1, k2 = jax.random.split(key)

    pred = jax.random.normal(k1, (B, A, S, S, 5 + C), jnp.float32)

    # deterministic target: obj flag every 7th cell, positive boxes, valid class ids
    flat_idx = jnp.arange(B * A * S * S).reshape(B, A, S, S)
    obj_flag = (flat_idx % 7 == 0).astype(jnp.float32)[..., None]
    box = jax.random.uniform(k2, (B, A, S, S, 4), jnp.float32, 0.1, 1.0)
    cls = (flat_idx % C).astype(jnp.float32)[..., None]
    target = jnp.concatenate([obj_flag, box, cls], axis=-1)      # (B,A,S,S,6)

    anchors = jnp.array([[0.28, 0.22], [0.38, 0.48], [0.90, 0.78]], jnp.float32)

    loss = jax.jit(yolo_loss)(pred, target, anchors)
    loss = jax.block_until_ready(loss)

    ref = reference_loss(pred, target, anchors)
    assert jnp.isfinite(loss), loss
    assert jnp.allclose(loss, ref, rtol=5e-3, atol=5e-3), (loss, ref)
    print("KERNEL_OK")
</pallas_src>

<mosaic_0001>
module attributes {stable_mosaic.version = 11 : i64} {
  func.func @yolo_loss_kernel(%arg0: i32, %arg1: i32, %arg2: memref<1x13x1x128xf32, #tpu.memory_space<vmem>>, %arg3: memref<1x6x1x128xf32, #tpu.memory_space<vmem>>, %arg4: memref<1x4x128xf32, #tpu.memory_space<vmem>>, %arg5: memref<1x6x128xf32, #tpu.memory_space<vmem>>, %arg6: memref<1x128xf32, #tpu.memory_space<vmem>>, %arg7: memref<1x128xf32, #tpu.memory_space<vmem>>, %arg8: memref<1x128xf32, #tpu.memory_space<vmem>>, %arg9: memref<1x128xf32, #tpu.memory_space<vmem>>, %arg10: memref<1x128xf32, #tpu.memory_space<vmem>>, %arg11: memref<1x128xf32, #tpu.memory_space<vmem>>) attributes {dimension_semantics = [#tpu.dimension_semantics<parallel>, #tpu.dimension_semantics<arbitrary>], iteration_bounds = array<i64: 3, 1>, scalar_prefetch = 0 : i64, scratch_operands = 6 : i64, tpu.core_type = #tpu.core_type<tc>, window_params = [{transform_indices = @transform_0, window_bounds = array<i64: 1, 13, 1, 128>}, {transform_indices = @transform_1, window_bounds = array<i64: 1, 6, 1, 128>}, {transform_indices = @transform_2, window_bounds = array<i64: 1, 4, 128>}, {transform_indices = @transform_3, window_bounds = array<i64: 1, 6, 128>}]} {
    %c0_i32 = arith.constant 0 : i32
    %0 = arith.cmpi eq, %arg1, %c0_i32 : i32
    %1 = arith.extui %0 : i1 to i32
    %c0_i32_0 = arith.constant 0 : i32
    %2 = arith.cmpi ne, %1, %c0_i32_0 : i32
    scf.if %2 {
      %cst_146 = arith.constant 0.000000e+00 : f32
      %260 = vector.broadcast %cst_146 : f32 to vector<1x128xf32>
      %c0_147 = arith.constant 0 : index
      %c0_148 = arith.constant 0 : index
      %261 = vector.load %arg6[%c0_147, %c0_148] : memref<1x128xf32, #tpu.memory_space<vmem>>, vector<1x128xf32>
      tpu.vector_store %arg6[%c0_147, %c0_148], %260 {strides = array<i32>} : memref<1x128xf32, #tpu.memory_space<vmem>>, vector<1x128xf32>,
      %c0_149 = arith.constant 0 : index
      %c0_150 = arith.constant 0 : index
      %262 = vector.load %arg7[%c0_149, %c0_150] : memref<1x128xf32, #tpu.memory_space<vmem>>, vector<1x128xf32>
      tpu.vector_store %arg7[%c0_149, %c0_150], %260 {strides = array<i32>} : memref<1x128xf32, #tpu.memory_space<vmem>>, vector<1x128xf32>,
      %c0_151 = arith.constant 0 : index
      %c0_152 = arith.constant 0 : index
      %263 = vector.load %arg8[%c0_151, %c0_152] : memref<1x128xf32, #tpu.memory_space<vmem>>, vector<1x128xf32>
      tpu.vector_store %arg8[%c0_151, %c0_152], %260 {strides = array<i32>} : memref<1x128xf32, #tpu.memory_space<vmem>>, vector<1x128xf32>,
      %c0_153 = arith.constant 0 : index
      %c0_154 = arith.constant 0 : index
      %264 = vector.load %arg9[%c0_153, %c0_154] : memref<1x128xf32, #tpu.memory_space<vmem>>, vector<1x128xf32>
      tpu.vector_store %arg9[%c0_153, %c0_154], %260 {strides = array<i32>} : memref<1x128xf32, #tpu.memory_space<vmem>>, vector<1x128xf32>,
      %c0_155 = arith.constant 0 : index
      %c0_156 = arith.constant 0 : index
      %265 = vector.load %arg10[%c0_155, %c0_156] : memref<1x128xf32, #tpu.memory_space<vmem>>, vector<1x128xf32>
      tpu.vector_store %arg10[%c0_155, %c0_156], %260 {strides = array<i32>} : memref<1x128xf32, #tpu.memory_space<vmem>>, vector<1x128xf32>,
      %c0_157 = arith.constant 0 : index
      %c0_158 = arith.constant 0 : index
      %266 = vector.load %arg11[%c0_157, %c0_158] : memref<1x128xf32, #tpu.memory_space<vmem>>, vector<1x128xf32>
      tpu.vector_store %arg11[%c0_157, %c0_158], %260 {strides = array<i32>} : memref<1x128xf32, #tpu.memory_space<vmem>>, vector<1x128xf32>,
    } else {
    }
    %c0 = arith.constant 0 : index
    %c0_1 = arith.constant 0 : index
    %c0_2 = arith.constant 0 : index
    %c0_3 = arith.constant 0 : index
    %3 = vector.load %arg3[%c0, %c0_1, %c0_2, %c0_3] : memref<1x6x1x128xf32, #tpu.memory_space<vmem>>, vector<1x1x1x128xf32>
    %4 = vector.shape_cast %3 : vector<1x1x1x128xf32> to vector<1x128xf32>
    %cst = arith.constant 1.000000e+00 : f32
    %5 = vector.broadcast %cst : f32 to vector<1x128xf32>
    %6 = arith.cmpf oeq, %4, %5 : vector<1x128xf32>
    %7 = arith.extui %6 : vector<1x128xi1> to vector<1x128xi32>
    %8 = arith.sitofp %7 : vector<1x128xi32> to vector<1x128xf32>
    %cst_4 = arith.constant 0.000000e+00 : f32
    %9 = vector.broadcast %cst_4 : f32 to vector<1x128xf32>
    %10 = arith.cmpf oeq, %4, %9 : vector<1x128xf32>
    %11 = arith.extui %10 : vector<1x128xi1> to vector<1x128xi32>
    %12 = arith.sitofp %11 : vector<1x128xi32> to vector<1x128xf32>
    %c0_5 = arith.constant 0 : index
    %c0_6 = arith.constant 0 : index
    %c0_7 = arith.constant 0 : index
    %c0_8 = arith.constant 0 : index
    %13 = vector.load %arg2[%c0_5, %c0_6, %c0_7, %c0_8] : memref<1x13x1x128xf32, #tpu.memory_space<vmem>>, vector<1x1x1x128xf32>
    %14 = vector.shape_cast %13 : vector<1x1x1x128xf32> to vector<1x128xf32>
    %15 = math.absf %14 : vector<1x128xf32>
    %cst_9 = arith.constant 0.000000e+00 : f32
    %16 = vector.broadcast %cst_9 : f32 to vector<1x128xf32>
    %17 = arith.subf %16, %15 : vector<1x128xf32>
    %18 = math.exp %17 : vector<1x128xf32>
    %cst_10 = arith.constant 0.000000e+00 : f32
    %19 = vector.broadcast %cst_10 : f32 to vector<1x128xf32>
    %20 = arith.maximumf %14, %19 : vector<1x128xf32>
    %cst_11 = arith.constant 1.000000e+00 : f32
    %21 = vector.broadcast %cst_11 : f32 to vector<1x128xf32>
    %22 = arith.addf %21, %18 : vector<1x128xf32>
    %23 = math.log %22 : vector<1x128xf32>
    %24 = arith.addf %20, %23 : vector<1x128xf32>
    %c0_12 = arith.constant 0 : index
    %c0_13 = arith.constant 0 : index
    %25 = vector.load %arg6[%c0_12, %c0_13] : memref<1x128xf32, #tpu.memory_space<vmem>>, vector<1x128xf32>
    %26 = arith.mulf %24, %12 : vector<1x128xf32>
    %27 = arith.addf %25, %26 : vector<1x128xf32>
    %c0_14 = arith.constant 0 : index
    %c0_15 = arith.constant 0 : index
    %28 = vector.load %arg6[%c0_14, %c0_15] : memref<1x128xf32, #tpu.memory_space<vmem>>, vector<1x128xf32>
    tpu.vector_store %arg6[%c0_14, %c0_15], %27 {strides = array<i32>} : memref<1x128xf32, #tpu.memory_space<vmem>>, vector<1x128xf32>,
    %c0_16 = arith.constant 0 : index
    %c0_17 = arith.constant 0 : index
    %29 = vector.load %arg7[%c0_16, %c0_17] : memref<1x128xf32, #tpu.memory_space<vmem>>, vector<1x128xf32>
    %30 = arith.addf %29, %12 : vector<1x128xf32>
    %c0_18 = arith.constant 0 : index
    %c0_19 = arith.constant 0 : index
    %31 = vector.load %arg7[%c0_18, %c0_19] : memref<1x128xf32, #tpu.memory_space<vmem>>, vector<1x128xf32>
    tpu.vector_store %arg7[%c0_18, %c0_19], %30 {strides = array<i32>} : memref<1x128xf32, #tpu.memory_space<vmem>>, vector<1x128xf32>,
    %cst_20 = arith.constant 5.000000e-01 : f32
    %32 = vector.broadcast %cst_20 : f32 to vector<1x128xf32>
    %33 = arith.mulf %32, %14 : vector<1x128xf32>
    %34 = math.tanh %33 : vector<1x128xf32>
    %cst_21 = arith.constant 5.000000e-01 : f32
    %35 = vector.broadcast %cst_21 : f32 to vector<1x128xf32>
    %36 = arith.mulf %35, %34 : vector<1x128xf32>
    %cst_22 = arith.constant 5.000000e-01 : f32
    %37 = vector.broadcast %cst_22 : f32 to vector<1x128xf32>
    %38 = arith.addf %36, %37 : vector<1x128xf32>
    %c0_23 = arith.constant 0 : index
    %c1 = arith.constant 1 : index
    %c0_24 = arith.constant 0 : index
    %c0_25 = arith.constant 0 : index
    %39 = vector.load %arg2[%c0_23, %c1, %c0_24, %c0_25] : memref<1x13x1x128xf32, #tpu.memory_space<vmem>>, vector<1x1x1x128xf32>
    %40 = vector.shape_cast %39 : vector<1x1x1x128xf32> to vector<1x128xf32>
    %cst_26 = arith.constant 5.000000e-01 : f32
    %41 = vector.broadcast %cst_26 : f32 to vector<1x128xf32>
    %42 = arith.mulf %41, %40 : vector<1x128xf32>
    %43 = math.tanh %42 : vector<1x128xf32>
    %cst_27 = arith.constant 5.000000e-01 : f32
    %44 = vector.broadcast %cst_27 : f32 to vector<1x128xf32>
    %45 = arith.mulf %44, %43 : vector<1x128xf32>
    %cst_28 = arith.constant 5.000000e-01 : f32
    %46 = vector.broadcast %cst_28 : f32 to vector<1x128xf32>
    %47 = arith.addf %45, %46 : vector<1x128xf32>
    %c0_29 = arith.constant 0 : index
    %c2 = arith.constant 2 : index
    %c0_30 = arith.constant 0 : index
    %c0_31 = arith.constant 0 : index
    %48 = vector.load %arg2[%c0_29, %c2, %c0_30, %c0_31] : memref<1x13x1x128xf32, #tpu.memory_space<vmem>>, vector<1x1x1x128xf32>
    %49 = vector.shape_cast %48 : vector<1x1x1x128xf32> to vector<1x128xf32>
    %cst_32 = arith.constant 5.000000e-01 : f32
    %50 = vector.broadcast %cst_32 : f32 to vector<1x128xf32>
    %51 = arith.mulf %50, %49 : vector<1x128xf32>
    %52 = math.tanh %51 : vector<1x128xf32>
    %cst_33 = arith.constant 5.000000e-01 : f32
    %53 = vector.broadcast %cst_33 : f32 to vector<1x128xf32>
    %54 = arith.mulf %53, %52 : vector<1x128xf32>
    %cst_34 = arith.constant 5.000000e-01 : f32
    %55 = vector.broadcast %cst_34 : f32 to vector<1x128xf32>
    %56 = arith.addf %54, %55 : vector<1x128xf32>
    %c0_35 = arith.constant 0 : index
    %c3 = arith.constant 3 : index
    %c0_36 = arith.constant 0 : index
    %c0_37 = arith.constant 0 : index
    %57 = vector.load %arg2[%c0_35, %c3, %c0_36, %c0_37] : memref<1x13x1x128xf32, #tpu.memory_space<vmem>>, vector<1x1x1x128xf32>
    %58 = vector.shape_cast %57 : vector<1x1x1x128xf32> to vector<1x128xf32>
    %c0_38 = arith.constant 0 : index
    %c4 = arith.constant 4 : index
    %c0_39 = arith.constant 0 : index
    %c0_40 = arith.constant 0 : index
    %59 = vector.load %arg2[%c0_38, %c4, %c0_39, %c0_40] : memref<1x13x1x128xf32, #tpu.memory_space<vmem>>, vector<1x1x1x128xf32>
    %60 = vector.shape_cast %59 : vector<1x1x1x128xf32> to vector<1x128xf32>
    %c0_41 = arith.constant 0 : index
    %c0_42 = arith.constant 0 : index
    %c0_43 = arith.constant 0 : index
    %61 = vector.load %arg4[%c0_41, %c0_42, %c0_43] : memref<1x4x128xf32, #tpu.memory_space<vmem>>, vector<1x1x128xf32>
    %62 = vector.shape_cast %61 : vector<1x1x128xf32> to vector<1x128xf32>
    %c0_44 = arith.constant 0 : index
    %c1_45 = arith.constant 1 : index
    %c0_46 = arith.constant 0 : index
    %63 = vector.load %arg4[%c0_44, %c1_45, %c0_46] : memref<1x4x128xf32, #tpu.memory_space<vmem>>, vector<1x1x128xf32>
    %64 = vector.shape_cast %63 : vector<1x1x128xf32> to vector<1x128xf32>
    %c0_47 = arith.constant 0 : index
    %c2_48 = arith.constant 2 : index
    %c0_49 = arith.constant 0 : index
    %65 = vector.load %arg4[%c0_47, %c2_48, %c0_49] : memref<1x4x128xf32, #tpu.memory_space<vmem>>, vector<1x1x128xf32>
    %66 = vector.shape_cast %65 : vector<1x1x128xf32> to vector<1x128xf32>
    %c0_50 = arith.constant 0 : index
    %c3_51 = arith.constant 3 : index
    %c0_52 = arith.constant 0 : index
    %67 = vector.load %arg4[%c0_50, %c3_51, %c0_52] : memref<1x4x128xf32, #tpu.memory_space<vmem>>, vector<1x1x128xf32>
    %68 = vector.shape_cast %67 : vector<1x1x128xf32> to vector<1x128xf32>
    %69 = math.exp %58 : vector<1x128xf32>
    %70 = arith.mulf %69, %62 : vector<1x128xf32>
    %71 = math.exp %60 : vector<1x128xf32>
    %72 = arith.mulf %71, %64 : vector<1x128xf32>
    %c0_53 = arith.constant 0 : index
    %c1_54 = arith.constant 1 : index
    %c0_55 = arith.constant 0 : index
    %c0_56 = arith.constant 0 : index
    %73 = vector.load %arg3[%c0_53, %c1_54, %c0_55, %c0_56] : memref<1x6x1x128xf32, #tpu.memory_space<vmem>>, vector<1x1x1x128xf32>
    %74 = vector.shape_cast %73 : vector<1x1x1x128xf32> to vector<1x128xf32>
    %c0_57 = arith.constant 0 : index
    %c2_58 = arith.constant 2 : index
    %c0_59 = arith.constant 0 : index
    %c0_60 = arith.constant 0 : index
    %75 = vector.load %arg3[%c0_57, %c2_58, %c0_59, %c0_60] : memref<1x6x1x128xf32, #tpu.memory_space<vmem>>, vector<1x1x1x128xf32>
    %76 = vector.shape_cast %75 : vector<1x1x1x128xf32> to vector<1x128xf32>
    %c0_61 = arith.constant 0 : index
    %c3_62 = arith.constant 3 : index
    %c0_63 = arith.constant 0 : index
    %c0_64 = arith.constant 0 : index
    %77 = vector.load %arg3[%c0_61, %c3_62, %c0_63, %c0_64] : memref<1x6x1x128xf32, #tpu.memory_space<vmem>>, vector<1x1x1x128xf32>
    %78 = vector.shape_cast %77 : vector<1x1x1x128xf32> to vector<1x128xf32>
    %c0_65 = arith.constant 0 : index
    %c4_66 = arith.constant 4 : index
    %c0_67 = arith.constant 0 : index
    %c0_68 = arith.constant 0 : index
    %79 = vector.load %arg3[%c0_65, %c4_66, %c0_67, %c0_68] : memref<1x6x1x128xf32, #tpu.memory_space<vmem>>, vector<1x1x1x128xf32>
    %80 = vector.shape_cast %79 : vector<1x1x1x128xf32> to vector<1x128xf32>
    %cst_69 = arith.constant 5.000000e-01 : f32
    %81 = vector.broadcast %cst_69 : f32 to vector<1x128xf32>
    %82 = arith.mulf %81, %70 : vector<1x128xf32>
    %83 = arith.addf %47, %82 : vector<1x128xf32>
    %cst_70 = arith.constant 5.000000e-01 : f32
    %84 = vector.broadcast %cst_70 : f32 to vector<1x128xf32>
    %85 = arith.mulf %84, %78 : vector<1x128xf32>
    %86 = arith.addf %74, %85 : vector<1x128xf32>
    %87 = arith.minimumf %83, %86 : vector<1x128xf32>
    %cst_71 = arith.constant 5.000000e-01 : f32
    %88 = vector.broadcast %cst_71 : f32 to vector<1x128xf32>
    %89 = arith.mulf %88, %70 : vector<1x128xf32>
    %90 = arith.subf %47, %89 : vector<1x128xf32>
    %cst_72 = arith.constant 5.000000e-01 : f32
    %91 = vector.broadcast %cst_72 : f32 to vector<1x128xf32>
    %92 = arith.mulf %91, %78 : vector<1x128xf32>
    %93 = arith.subf %74, %92 : vector<1x128xf32>
    %94 = arith.maximumf %90, %93 : vector<1x128xf32>
    %95 = arith.subf %87, %94 : vector<1x128xf32>
    %cst_73 = arith.constant 0.000000e+00 : f32
    %96 = vector.broadcast %cst_73 : f32 to vector<1x128xf32>
    %97 = arith.maximumf %95, %96 : vector<1x128xf32>
    %cst_74 = arith.constant 5.000000e-01 : f32
    %98 = vector.broadcast %cst_74 : f32 to vector<1x128xf32>
    %99 = arith.mulf %98, %72 : vector<1x128xf32>
    %100 = arith.addf %56, %99 : vector<1x128xf32>
    %cst_75 = arith.constant 5.000000e-01 : f32
    %101 = vector.broadcast %cst_75 : f32 to vector<1x128xf32>
    %102 = arith.mulf %101, %80 : vector<1x128xf32>
    %103 = arith.addf %76, %102 : vector<1x128xf32>
    %104 = arith.minimumf %100, %103 : vector<1x128xf32>
    %cst_76 = arith.constant 5.000000e-01 : f32
    %105 = vector.broadcast %cst_76 : f32 to vector<1x128xf32>
    %106 = arith.mulf %105, %72 : vector<1x128xf32>
    %107 = arith.subf %56, %106 : vector<1x128xf32>
    %cst_77 = arith.constant 5.000000e-01 : f32
    %108 = vector.broadcast %cst_77 : f32 to vector<1x128xf32>
    %109 = arith.mulf %108, %80 : vector<1x128xf32>
    %110 = arith.subf %76, %109 : vector<1x128xf32>
    %111 = arith.maximumf %107, %110 : vector<1x128xf32>
    %112 = arith.subf %104, %111 : vector<1x128xf32>
    %cst_78 = arith.constant 0.000000e+00 : f32
    %113 = vector.broadcast %cst_78 : f32 to vector<1x128xf32>
    %114 = arith.maximumf %112, %113 : vector<1x128xf32>
    %115 = arith.mulf %97, %114 : vector<1x128xf32>
    %116 = arith.mulf %70, %72 : vector<1x128xf32>
    %117 = math.absf %116 : vector<1x128xf32>
    %118 = arith.mulf %78, %80 : vector<1x128xf32>
    %119 = math.absf %118 : vector<1x128xf32>
    %120 = arith.addf %117, %119 : vector<1x128xf32>
    %121 = arith.subf %120, %115 : vector<1x128xf32>
    %cst_79 = arith.constant 9.99999997E-7 : f32
    %122 = vector.broadcast %cst_79 : f32 to vector<1x128xf32>
    %123 = arith.addf %121, %122 : vector<1x128xf32>
    %124 = tpu.reciprocal %123 {approx = true} : vector<1x128xf32> -> vector<1x128xf32>
    %125 = arith.mulf %115, %124 : vector<1x128xf32>
    %126 = arith.mulf %125, %4 : vector<1x128xf32>
    %127 = arith.subf %38, %126 : vector<1x128xf32>
    %128 = arith.mulf %127, %127 : vector<1x128xf32>
    %c0_80 = arith.constant 0 : index
    %c0_81 = arith.constant 0 : index
    %129 = vector.load %arg8[%c0_80, %c0_81] : memref<1x128xf32, #tpu.memory_space<vmem>>, vector<1x128xf32>
    %130 = arith.mulf %128, %8 : vector<1x128xf32>
    %131 = arith.addf %129, %130 : vector<1x128xf32>
    %c0_82 = arith.constant 0 : index
    %c0_83 = arith.constant 0 : index
    %132 = vector.load %arg8[%c0_82, %c0_83] : memref<1x128xf32, #tpu.memory_space<vmem>>, vector<1x128xf32>
    tpu.vector_store %arg8[%c0_82, %c0_83], %131 {strides = array<i32>} : memref<1x128xf32, #tpu.memory_space<vmem>>, vector<1x128xf32>,
    %c0_84 = arith.constant 0 : index
    %c0_85 = arith.constant 0 : index
    %133 = vector.load %arg9[%c0_84, %c0_85] : memref<1x128xf32, #tpu.memory_space<vmem>>, vector<1x128xf32>
    %134 = arith.addf %133, %8 : vector<1x128xf32>
    %c0_86 = arith.constant 0 : index
    %c0_87 = arith.constant 0 : index
    %135 = vector.load %arg9[%c0_86, %c0_87] : memref<1x128xf32, #tpu.memory_space<vmem>>, vector<1x128xf32>
    tpu.vector_store %arg9[%c0_86, %c0_87], %134 {strides = array<i32>} : memref<1x128xf32, #tpu.memory_space<vmem>>, vector<1x128xf32>,
    %136 = arith.mulf %78, %66 : vector<1x128xf32>
    %cst_88 = arith.constant 9.99999997E-7 : f32
    %137 = vector.broadcast %cst_88 : f32 to vector<1x128xf32>
    %138 = arith.addf %137, %136 : vector<1x128xf32>
    %139 = math.log %138 : vector<1x128xf32>
    %140 = arith.mulf %80, %68 : vector<1x128xf32>
    %cst_89 = arith.constant 9.99999997E-7 : f32
    %141 = vector.broadcast %cst_89 : f32 to vector<1x128xf32>
    %142 = arith.addf %141, %140 : vector<1x128xf32>
    %143 = math.log %142 : vector<1x128xf32>
    %144 = arith.subf %47, %74 : vector<1x128xf32>
    %145 = arith.mulf %144, %144 : vector<1x128xf32>
    %146 = arith.subf %56, %76 : vector<1x128xf32>
    %147 = arith.mulf %146, %146 : vector<1x128xf32>
    %148 = arith.addf %145, %147 : vector<1x128xf32>
    %149 = arith.subf %58, %139 : vector<1x128xf32>
    %150 = arith.mulf %149, %149 : vector<1x128xf32>
    %151 = arith.addf %148, %150 : vector<1x128xf32>
    %152 = arith.subf %60, %143 : vector<1x128xf32>
    %153 = arith.mulf %152, %152 : vector<1x128xf32>
    %154 = arith.addf %151, %153 : vector<1x128xf32>
    %c0_90 = arith.constant 0 : index
    %c0_91 = arith.constant 0 : index
    %155 = vector.load %arg10[%c0_90, %c0_91] : memref<1x128xf32, #tpu.memory_space<vmem>>, vector<1x128xf32>
    %156 = arith.mulf %154, %8 : vector<1x128xf32>
    %157 = arith.addf %155, %156 : vector<1x128xf32>
    %c0_92 = arith.constant 0 : index
    %c0_93 = arith.constant 0 : index
    %158 = vector.load %arg10[%c0_92, %c0_93] : memref<1x128xf32, #tpu.memory_space<vmem>>, vector<1x128xf32>
    tpu.vector_store %arg10[%c0_92, %c0_93], %157 {strides = array<i32>} : memref<1x128xf32, #tpu.memory_space<vmem>>, vector<1x128xf32>,
    %c0_94 = arith.constant 0 : index
    %c5 = arith.constant 5 : index
    %c0_95 = arith.constant 0 : index
    %c0_96 = arith.constant 0 : index
    %159 = vector.load %arg2[%c0_94, %c5, %c0_95, %c0_96] : memref<1x13x1x128xf32, #tpu.memory_space<vmem>>, vector<1x1x1x128xf32>
    %160 = vector.shape_cast %159 : vector<1x1x1x128xf32> to vector<1x128xf32>
    %c0_97 = arith.constant 0 : index
    %c6 = arith.constant 6 : index
    %c0_98 = arith.constant 0 : index
    %c0_99 = arith.constant 0 : index
    %161 = vector.load %arg2[%c0_97, %c6, %c0_98, %c0_99] : memref<1x13x1x128xf32, #tpu.memory_space<vmem>>, vector<1x1x1x128xf32>
    %162 = vector.shape_cast %161 : vector<1x1x1x128xf32> to vector<1x128xf32>
    %c0_100 = arith.constant 0 : index
    %c7 = arith.constant 7 : index
    %c0_101 = arith.constant 0 : index
    %c0_102 = arith.constant 0 : index
    %163 = vector.load %arg2[%c0_100, %c7, %c0_101, %c0_102] : memref<1x13x1x128xf32, #tpu.memory_space<vmem>>, vector<1x1x1x128xf32>
    %164 = vector.shape_cast %163 : vector<1x1x1x128xf32> to vector<1x128xf32>
    %c0_103 = arith.constant 0 : index
    %c8 = arith.constant 8 : index
    %c0_104 = arith.constant 0 : index
    %c0_105 = arith.constant 0 : index
    %165 = vector.load %arg2[%c0_103, %c8, %c0_104, %c0_105] : memref<1x13x1x128xf32, #tpu.memory_space<vmem>>, vector<1x1x1x128xf32>
    %166 = vector.shape_cast %165 : vector<1x1x1x128xf32> to vector<1x128xf32>
    %c0_106 = arith.constant 0 : index
    %c9 = arith.constant 9 : index
    %c0_107 = arith.constant 0 : index
    %c0_108 = arith.constant 0 : index
    %167 = vector.load %arg2[%c0_106, %c9, %c0_107, %c0_108] : memref<1x13x1x128xf32, #tpu.memory_space<vmem>>, vector<1x1x1x128xf32>
    %168 = vector.shape_cast %167 : vector<1x1x1x128xf32> to vector<1x128xf32>
    %c0_109 = arith.constant 0 : index
    %c10 = arith.constant 10 : index
    %c0_110 = arith.constant 0 : index
    %c0_111 = arith.constant 0 : index
    %169 = vector.load %arg2[%c0_109, %c10, %c0_110, %c0_111] : memref<1x13x1x128xf32, #tpu.memory_space<vmem>>, vector<1x1x1x128xf32>
    %170 = vector.shape_cast %169 : vector<1x1x1x128xf32> to vector<1x128xf32>
    %c0_112 = arith.constant 0 : index
    %c11 = arith.constant 11 : index
    %c0_113 = arith.constant 0 : index
    %c0_114 = arith.constant 0 : index
    %171 = vector.load %arg2[%c0_112, %c11, %c0_113, %c0_114] : memref<1x13x1x128xf32, #tpu.memory_space<vmem>>, vector<1x1x1x128xf32>
    %172 = vector.shape_cast %171 : vector<1x1x1x128xf32> to vector<1x128xf32>
    %c0_115 = arith.constant 0 : index
    %c12 = arith.constant 12 : index
    %c0_116 = arith.constant 0 : index
    %c0_117 = arith.constant 0 : index
    %173 = vector.load %arg2[%c0_115, %c12, %c0_116, %c0_117] : memref<1x13x1x128xf32, #tpu.memory_space<vmem>>, vector<1x1x1x128xf32>
    %174 = vector.shape_cast %173 : vector<1x1x1x128xf32> to vector<1x128xf32>
    %175 = arith.maximumf %160, %162 : vector<1x128xf32>
    %176 = arith.maximumf %175, %164 : vector<1x128xf32>
    %177 = arith.maximumf %176, %166 : vector<1x128xf32>
    %178 = arith.maximumf %177, %168 : vector<1x128xf32>
    %179 = arith.maximumf %178, %170 : vector<1x128xf32>
    %180 = arith.maximumf %179, %172 : vector<1x128xf32>
    %181 = arith.maximumf %180, %174 : vector<1x128xf32>
    %c0_118 = arith.constant 0 : index
    %c5_119 = arith.constant 5 : index
    %c0_120 = arith.constant 0 : index
    %c0_121 = arith.constant 0 : index
    %182 = vector.load %arg3[%c0_118, %c5_119, %c0_120, %c0_121] : memref<1x6x1x128xf32, #tpu.memory_space<vmem>>, vector<1x1x1x128xf32>
    %183 = vector.shape_cast %182 : vector<1x1x1x128xf32> to vector<1x128xf32>
    %cst_122 = arith.constant 0.000000e+00 : f32
    %184 = vector.broadcast %cst_122 : f32 to vector<1x128xf32>
    %cst_123 = arith.constant 0.000000e+00 : f32
    %185 = vector.broadcast %cst_123 : f32 to vector<1x128xf32>
    %186 = arith.subf %160, %181 : vector<1x128xf32>
    %187 = math.exp %186 : vector<1x128xf32>
    %188 = arith.addf %184, %187 : vector<1x128xf32>
    %cst_124 = arith.constant 0.000000e+00 : f32
    %189 = vector.broadcast %cst_124 : f32 to vector<1x128xf32>
    %190 = arith.cmpf oeq, %183, %189 : vector<1x128xf32>
    %cst_125 = arith.constant 0.000000e+00 : f32
    %191 = vector.broadcast %cst_125 : f32 to vector<1x128xf32>
    %192 = arith.select %190, %160, %191 : vector<1x128xi1>, vector<1x128xf32>
    %193 = arith.addf %185, %192 : vector<1x128xf32>
    %194 = arith.subf %162, %181 : vector<1x128xf32>
    %195 = math.exp %194 : vector<1x128xf32>
    %196 = arith.addf %188, %195 : vector<1x128xf32>
    %cst_126 = arith.constant 1.000000e+00 : f32
    %197 = vector.broadcast %cst_126 : f32 to vector<1x128xf32>
    %198 = arith.cmpf oeq, %183, %197 : vector<1x128xf32>
    %cst_127 = arith.constant 0.000000e+00 : f32
    %199 = vector.broadcast %cst_127 : f32 to vector<1x128xf32>
    %200 = arith.select %198, %162, %199 : vector<1x128xi1>, vector<1x128xf32>
    %201 = arith.addf %193, %200 : vector<1x128xf32>
    %202 = arith.subf %164, %181 : vector<1x128xf32>
    %203 = math.exp %202 : vector<1x128xf32>
    %204 = arith.addf %196, %203 : vector<1x128xf32>
    %cst_128 = arith.constant 2.000000e+00 : f32
    %205 = vector.broadcast %cst_128 : f32 to vector<1x128xf32>
    %206 = arith.cmpf oeq, %183, %205 : vector<1x128xf32>
    %cst_129 = arith.constant 0.000000e+00 : f32
    %207 = vector.broadcast %cst_129 : f32 to vector<1x128xf32>
    %208 = arith.select %206, %164, %207 : vector<1x128xi1>, vector<1x128xf32>
    %209 = arith.addf %201, %208 : vector<1x128xf32>
    %210 = arith.subf %166, %181 : vector<1x128xf32>
    %211 = math.exp %210 : vector<1x128xf32>
    %212 = arith.addf %204, %211 : vector<1x128xf32>
    %cst_130 = arith.constant 3.000000e+00 : f32
    %213 = vector.broadcast %cst_130 : f32 to vector<1x128xf32>
    %214 = arith.cmpf oeq, %183, %213 : vector<1x128xf32>
    %cst_131 = arith.constant 0.000000e+00 : f32
    %215 = vector.broadcast %cst_131 : f32 to vector<1x128xf32>
    %216 = arith.select %214, %166, %215 : vector<1x128xi1>, vector<1x128xf32>
    %217 = arith.addf %209, %216 : vector<1x128xf32>
    %218 = arith.subf %168, %181 : vector<1x128xf32>
    %219 = math.exp %218 : vector<1x128xf32>
    %220 = arith.addf %212, %219 : vector<1x128xf32>
    %cst_132 = arith.constant 4.000000e+00 : f32
    %221 = vector.broadcast %cst_132 : f32 to vector<1x128xf32>
    %222 = arith.cmpf oeq, %183, %221 : vector<1x128xf32>
    %cst_133 = arith.constant 0.000000e+00 : f32
    %223 = vector.broadcast %cst_133 : f32 to vector<1x128xf32>
    %224 = arith.select %222, %168, %223 : vector<1x128xi1>, vector<1x128xf32>
    %225 = arith.addf %217, %224 : vector<1x128xf32>
    %226 = arith.subf %170, %181 : vector<1x128xf32>
    %227 = math.exp %226 : vector<1x128xf32>
    %228 = arith.addf %220, %227 : vector<1x128xf32>
    %cst_134 = arith.constant 5.000000e+00 : f32
    %229 = vector.broadcast %cst_134 : f32 to vector<1x128xf32>
    %230 = arith.cmpf oeq, %183, %229 : vector<1x128xf32>
    %cst_135 = arith.constant 0.000000e+00 : f32
    %231 = vector.broadcast %cst_135 : f32 to vector<1x128xf32>
    %232 = arith.select %230, %170, %231 : vector<1x128xi1>, vector<1x128xf32>
    %233 = arith.addf %225, %232 : vector<1x128xf32>
    %234 = arith.subf %172, %181 : vector<1x128xf32>
    %235 = math.exp %234 : vector<1x128xf32>
    %236 = arith.addf %228, %235 : vector<1x128xf32>
    %cst_136 = arith.constant 6.000000e+00 : f32
    %237 = vector.broadcast %cst_136 : f32 to vector<1x128xf32>
    %238 = arith.cmpf oeq, %183, %237 : vector<1x128xf32>
    %cst_137 = arith.constant 0.000000e+00 : f32
    %239 = vector.broadcast %cst_137 : f32 to vector<1x128xf32>
    %240 = arith.select %238, %172, %239 : vector<1x128xi1>, vector<1x128xf32>
    %241 = arith.addf %233, %240 : vector<1x128xf32>
    %242 = arith.subf %174, %181 : vector<1x128xf32>
    %243 = math.exp %242 : vector<1x128xf32>
    %244 = arith.addf %236, %243 : vector<1x128xf32>
    %cst_138 = arith.constant 7.000000e+00 : f32
    %245 = vector.broadcast %cst_138 : f32 to vector<1x128xf32>
    %246 = arith.cmpf oeq, %183, %245 : vector<1x128xf32>
    %cst_139 = arith.constant 0.000000e+00 : f32
    %247 = vector.broadcast %cst_139 : f32 to vector<1x128xf32>
    %248 = arith.select %246, %174, %247 : vector<1x128xi1>, vector<1x128xf32>
    %249 = arith.addf %241, %248 : vector<1x128xf32>
    %250 = math.log %244 : vector<1x128xf32>
    %251 = arith.addf %181, %250 : vector<1x128xf32>
    %252 = arith.subf %251, %249 : vector<1x128xf32>
    %c0_140 = arith.constant 0 : index
    %c0_141 = arith.constant 0 : index
    %253 = vector.load %arg11[%c0_140, %c0_141] : memref<1x128xf32, #tpu.memory_space<vmem>>, vector<1x128xf32>
    %254 = arith.mulf %252, %8 : vector<1x128xf32>
    %255 = arith.addf %253, %254 : vector<1x128xf32>
    %c0_142 = arith.constant 0 : index
    %c0_143 = arith.constant 0 : index
    %256 = vector.load %arg11[%c0_142, %c0_143] : memref<1x128xf32, #tpu.memory_space<vmem>>, vector<1x128xf32>
    tpu.vector_store %arg11[%c0_142, %c0_143], %255 {strides = array<i32>} : memref<1x128xf32, #tpu.memory_space<vmem>>, vector<1x128xf32>,
    %c0_i32_144 = arith.constant 0 : i32
    %257 = arith.cmpi eq, %arg1, %c0_i32_144 : i32
    %258 = arith.extui %257 : i1 to i32
    %c0_i32_145 = arith.constant 0 : i32
    %259 = arith.cmpi ne, %258, %c0_i32_145 : i32
    scf.if %259 {
      %c0_146 = arith.constant 0 : index
      %c0_147 = arith.constant 0 : index
      %260 = vector.load %arg6[%c0_146, %c0_147] : memref<1x128xf32, #tpu.memory_space<vmem>>, vector<1x128xf32>
      %cst_148 = arith.constant dense<0.000000e+00> : vector<128xf32>
      %261 = vector.multi_reduction <add>, %260, %cst_148 [0] : vector<1x128xf32> to vector<128xf32>
      %262 = vector.shape_cast %261 : vector<128xf32> to vector<1x128xf32>
      %c0_149 = arith.constant 0 : index
      %c0_150 = arith.constant 0 : index
      %c0_151 = arith.constant 0 : index
      %263 = vector.load %arg5[%c0_149, %c0_150, %c0_151] : memref<1x6x128xf32, #tpu.memory_space<vmem>>, vector<1x1x128xf32>
      %264 = vector.shape_cast %263 : vector<1x1x128xf32> to vector<1x128xf32>
      %265 = vector.shape_cast %262 : vector<1x128xf32> to vector<1x1x128xf32>
      tpu.vector_store %arg5[%c0_149, %c0_150, %c0_151], %265 {strides = array<i32>} : memref<1x6x128xf32, #tpu.memory_space<vmem>>, vector<1x1x128xf32>,
      %c0_152 = arith.constant 0 : index
      %c0_153 = arith.constant 0 : index
      %266 = vector.load %arg7[%c0_152, %c0_153] : memref<1x128xf32, #tpu.memory_space<vmem>>, vector<1x128xf32>
      %cst_154 = arith.constant dense<0.000000e+00> : vector<128xf32>
      %267 = vector.multi_reduction <add>, %266, %cst_154 [0] : vector<1x128xf32> to vector<128xf32>
      %268 = vector.shape_cast %267 : vector<128xf32> to vector<1x128xf32>
      %c0_155 = arith.constant 0 : index
      %c1_156 = arith.constant 1 : index
      %c0_157 = arith.constant 0 : index
      %269 = vector.load %arg5[%c0_155, %c1_156, %c0_157] : memref<1x6x128xf32, #tpu.memory_space<vmem>>, vector<1x1x128xf32>
      %270 = vector.shape_cast %269 : vector<1x1x128xf32> to vector<1x128xf32>
      %271 = vector.shape_cast %268 : vector<1x128xf32> to vector<1x1x128xf32>
      tpu.vector_store %arg5[%c0_155, %c1_156, %c0_157], %271 {strides = array<i32>} : memref<1x6x128xf32, #tpu.memory_space<vmem>>, vector<1x1x128xf32>,
      %c0_158 = arith.constant 0 : index
      %c0_159 = arith.constant 0 : index
      %272 = vector.load %arg8[%c0_158, %c0_159] : memref<1x128xf32, #tpu.memory_space<vmem>>, vector<1x128xf32>
      %cst_160 = arith.constant dense<0.000000e+00> : vector<128xf32>
      %273 = vector.multi_reduction <add>, %272, %cst_160 [0] : vector<1x128xf32> to vector<128xf32>
      %274 = vector.shape_cast %273 : vector<128xf32> to vector<1x128xf32>
      %c0_161 = arith.constant 0 : index
      %c2_162 = arith.constant 2 : index
      %c0_163 = arith.constant 0 : index
      %275 = vector.load %arg5[%c0_161, %c2_162, %c0_163] : memref<1x6x128xf32, #tpu.memory_space<vmem>>, vector<1x1x128xf32>
      %276 = vector.shape_cast %275 : vector<1x1x128xf32> to vector<1x128xf32>
      %277 = vector.shape_cast %274 : vector<1x128xf32> to vector<1x1x128xf32>
      tpu.vector_store %arg5[%c0_161, %c2_162, %c0_163], %277 {strides = array<i32>} : memref<1x6x128xf32, #tpu.memory_space<vmem>>, vector<1x1x128xf32>,
      %c0_164 = arith.constant 0 : index
      %c0_165 = arith.constant 0 : index
      %278 = vector.load %arg9[%c0_164, %c0_165] : memref<1x128xf32, #tpu.memory_space<vmem>>, vector<1x128xf32>
      %cst_166 = arith.constant dense<0.000000e+00> : vector<128xf32>
      %279 = vector.multi_reduction <add>, %278, %cst_166 [0] : vector<1x128xf32> to vector<128xf32>
      %280 = vector.shape_cast %279 : vector<128xf32> to vector<1x128xf32>
      %c0_167 = arith.constant 0 : index
      %c3_168 = arith.constant 3 : index
      %c0_169 = arith.constant 0 : index
      %281 = vector.load %arg5[%c0_167, %c3_168, %c0_169] : memref<1x6x128xf32, #tpu.memory_space<vmem>>, vector<1x1x128xf32>
      %282 = vector.shape_cast %281 : vector<1x1x128xf32> to vector<1x128xf32>
      %283 = vector.shape_cast %280 : vector<1x128xf32> to vector<1x1x128xf32>
      tpu.vector_store %arg5[%c0_167, %c3_168, %c0_169], %283 {strides = array<i32>} : memref<1x6x128xf32, #tpu.memory_space<vmem>>, vector<1x1x128xf32>,
      %c0_170 = arith.constant 0 : index
      %c0_171 = arith.constant 0 : index
      %284 = vector.load %arg10[%c0_170, %c0_171] : memref<1x128xf32, #tpu.memory_space<vmem>>, vector<1x128xf32>
      %cst_172 = arith.constant dense<0.000000e+00> : vector<128xf32>
      %285 = vector.multi_reduction <add>, %284, %cst_172 [0] : vector<1x128xf32> to vector<128xf32>
      %286 = vector.shape_cast %285 : vector<128xf32> to vector<1x128xf32>
      %c0_173 = arith.constant 0 : index
      %c4_174 = arith.constant 4 : index
      %c0_175 = arith.constant 0 : index
      %287 = vector.load %arg5[%c0_173, %c4_174, %c0_175] : memref<1x6x128xf32, #tpu.memory_space<vmem>>, vector<1x1x128xf32>
      %288 = vector.shape_cast %287 : vector<1x1x128xf32> to vector<1x128xf32>
      %289 = vector.shape_cast %286 : vector<1x128xf32> to vector<1x1x128xf32>
      tpu.vector_store %arg5[%c0_173, %c4_174, %c0_175], %289 {strides = array<i32>} : memref<1x6x128xf32, #tpu.memory_space<vmem>>, vector<1x1x128xf32>,
      %c0_176 = arith.constant 0 : index
      %c0_177 = arith.constant 0 : index
      %290 = vector.load %arg11[%c0_176, %c0_177] : memref<1x128xf32, #tpu.memory_space<vmem>>, vector<1x128xf32>
      %cst_178 = arith.constant dense<0.000000e+00> : vector<128xf32>
      %291 = vector.multi_reduction <add>, %290, %cst_178 [0] : vector<1x128xf32> to vector<128xf32>
      %292 = vector.shape_cast %291 : vector<128xf32> to vector<1x128xf32>
      %c0_179 = arith.constant 0 : index
      %c5_180 = arith.constant 5 : index
      %c0_181 = arith.constant 0 : index
      %293 = vector.load %arg5[%c0_179, %c5_180, %c0_181] : memref<1x6x128xf32, #tpu.memory_space<vmem>>, vector<1x1x128xf32>
      %294 = vector.shape_cast %293 : vector<1x1x128xf32> to vector<1x128xf32>
      %295 = vector.shape_cast %292 : vector<1x128xf32> to vector<1x1x128xf32>
      tpu.vector_store %arg5[%c0_179, %c5_180, %c0_181], %295 {strides = array<i32>} : memref<1x6x128xf32, #tpu.memory_space<vmem>>, vector<1x1x128xf32>,
    } else {
    }
    return
  }
  func.func @transform_0(%arg0: i32, %arg1: i32) -> (i32, i32, i32, i32) {
    %c0_i32 = arith.constant 0 : i32
    %c0_i32_0 = arith.constant 0 : i32
    %c0_i32_1 = arith.constant 0 : i32
    return %arg0, %c0_i32, %arg1, %c0_i32_0 : i32, i32, i32, i32
  }
  func.func @transform_1(%arg0: i32, %arg1: i32) -> (i32, i32, i32, i32) {
    %c0_i32 = arith.constant 0 : i32
    %c0_i32_0 = arith.constant 0 : i32
    %c0_i32_1 = arith.constant 0 : i32
    return %arg0, %c0_i32, %arg1, %c0_i32_0 : i32, i32, i32, i32
  }
  func.func @transform_2(%arg0: i32, %arg1: i32) -> (i32, i32, i32) {
    %c0_i32 = arith.constant 0 : i32
    %c0_i32_0 = arith.constant 0 : i32
    %c0_i32_1 = arith.constant 0 : i32
    return %arg0, %c0_i32, %c0_i32_0 : i32, i32, i32
  }
  func.func @transform_3(%arg0: i32, %arg1: i32) -> (i32, i32, i32) {
    %c0_i32 = arith.constant 0 : i32
    %c0_i32_0 = arith.constant 0 : i32
    %c0_i32_1 = arith.constant 0 : i32
    return %arg0, %c0_i32, %c0_i32_0 : i32, i32, i32
  }
}

</mosaic_0001>

<llo_original>
// kernel: yolo_loss.1
$region0: #{yolo_loss.1}
  #allocation0 [shape = 'u32[]', space=smem, size = 0x4, offset = 0x4, fixed_abs, tag = 'smem constant byte address 0x4 - core index']
  #allocation1 [shape = 'u32[144,128]{1,0:T(1,128)}', space=vmem, size = 0x12000, scoped, tag = 'internal scratch']
  #allocation2 [shape = 'f32[1,128]{1,0:T(1,128)}', space=vmem, size = 0x200, scoped, tag = 'scratch operand']
  #allocation3 [shape = 'f32[1,128]{1,0:T(1,128)}', space=vmem, size = 0x200, scoped, tag = 'scratch operand']
  #allocation4 [shape = 'f32[1,128]{1,0:T(1,128)}', space=vmem, size = 0x200, scoped, tag = 'scratch operand']
  #allocation5 [shape = 'f32[1,128]{1,0:T(1,128)}', space=vmem, size = 0x200, scoped, tag = 'scratch operand']
  #allocation6 [shape = 'f32[1,128]{1,0:T(1,128)}', space=vmem, size = 0x200, scoped, tag = 'scratch operand']
  #allocation7 [shape = 'f32[1,128]{1,0:T(1,128)}', space=vmem, size = 0x200, scoped, tag = 'scratch operand']
  %s0 = inlined_call_operand.vmem [shape: f32[3,13,1,128], index: 0, kind: input, shape index: {}]
  %s1 = inlined_call_operand.vmem [shape: f32[3,6,1,128], index: 1, kind: input, shape index: {}]
  %s2 = inlined_call_operand.vmem [shape: f32[3,4,128], index: 2, kind: input, shape index: {}]
  %s3 = inlined_call_operand.vmem [shape: f32[3,6,128], index: 3, kind: output, shape index: {}]
  %s4 = sld [smem:[#allocation0]]
  $region53: #{yolo_loss.1} parent=0
    _
  %s6 = ssub.s32 1, %s4
  %s7 = scalar_select 0, %s6, %s4
  loop: start=0, step=1, limit=5
  $region2: #{yolo_loss.1} parent=0 // loop_pre_header
    _
  $region3: #{yolo_loss.1} parent=0 // loop_header
    %s9 = sphi 0, %s13
    %p10 = scmp.ge.s32.totalorder %s9, 5
    %s16 = sphi 0, %s28
    %s17 = sphi 0, %s24
    %s18 = sphi 0, %s16
    %s19 = sphi 0, %s17
    %s20 = sphi 0, %s18
    %s21 = sphi 0, %s19
    %s33 = sphi 0, %s35
    %s36 = sphi 0, %s33
    %s37 = sphi 0, %s36
    %s53 = sphi 0, %s37
    %s61 = sphi 0, %s63
    %s64 = sphi 0, %s61
    %s65 = sphi 0, %s64
    %s81 = sphi 0, %s65
    %s87 = sphi 0, %s89
    %s90 = sphi 0, %s87
    %s91 = sphi 0, %s90
    %s107 = sphi 0, %s91
    %s113 = sphi 0, %s115
    %s116 = sphi 0, %s113
    %s117 = sphi 0, %s116
    %s133 = sphi 0, %s117
  $region4: #{yolo_loss.1} parent=0 // loop_header_branch
    %12 = sbr.rel (%p10) target = $region8
  $region5: #{yolo_loss.1} parent=0 // loop_body
    %s14 = ssub.s32 %s9, 1
    %s15 = ssub.s32 %s9, 2
    %s22 = sadd.s32 1, %s17
    %p23 = scmp.ge.s32.totalorder %s22, 1
    %s24 = scalar_select %p23, 0, %s22
    %s25 = sadd.s32 1, %s16
    %s26 = scalar_select %p23, %s25, %s16
    %p27 = scmp.ge.s32.totalorder %s26, 3
    %s28 = scalar_select %p27, 0, %s26
    %s29 = ssub.s32 %s16, %s28
    %s30 = ssub.s32 %s17, %s24
    %s31 = sor.u32 %s29, %s30
    %p32 = scmp.eq.s32.totalorder %s31, 0
    %s34 = sadd.s32 %s33, 1
    %s35 = scalar_select %p32, %s33, %s34
    %p38 = pneg %p32
    %p39 = scmp.eq.s32.totalorder %s9, 2
    %p40 = por %p38, %p39
    %p41 = scmp.ne.s32.totalorder %s33, %s36
    %p42 = scmp.eq.s32.totalorder %s9, 0
    %p43 = por %p41, %p42
    %p44 = scmp.ne.s32.totalorder %s33, %s36
    %p45 = scmp.eq.s32.totalorder %s14, 2
    %p46 = por %p44, %p45
    %p47 = scmp.ne.s32.totalorder %s36, %s37
    %p48 = scmp.eq.s32.totalorder %s14, 0
    %p49 = por %p47, %p48
    %p50 = scmp.ne.s32.totalorder %s36, %s37
    %p51 = scmp.eq.s32.totalorder %s15, 2
    %p52 = por %p50, %p51
    %p54 = scmp.ne.s32.totalorder %s37, %s53
    %p55 = scmp.eq.s32.totalorder %s15, 0
    %p56 = por %p54, %p55
    %s57 = ssub.s32 %s16, %s28
    %s58 = ssub.s32 %s17, %s24
    %s59 = sor.u32 %s57, %s58
    %p60 = scmp.eq.s32.totalorder %s59, 0
    %s62 = sadd.s32 %s61, 1
    %s63 = scalar_select %p60, %s61, %s62
    %p66 = pneg %p60
    %p67 = scmp.eq.s32.totalorder %s9, 2
    %p68 = por %p66, %p67
    %p69 = scmp.ne.s32.totalorder %s61, %s64
    %p70 = scmp.eq.s32.totalorder %s9, 0
    %p71 = por %p69, %p70
    %p72 = scmp.ne.s32.totalorder %s61, %s64
    %p73 = scmp.eq.s32.totalorder %s14, 2
    %p74 = por %p72, %p73
    %p75 = scmp.ne.s32.totalorder %s64, %s65
    %p76 = scmp.eq.s32.totalorder %s14, 0
    %p77 = por %p75, %p76
    %p78 = scmp.ne.s32.totalorder %s64, %s65
    %p79 = scmp.eq.s32.totalorder %s15, 2
    %p80 = por %p78, %p79
    %p82 = scmp.ne.s32.totalorder %s65, %s81
    %p83 = scmp.eq.s32.totalorder %s15, 0
    %p84 = por %p82, %p83
    %s85 = ssub.s32 %s16, %s28
    %p86 = scmp.eq.s32.totalorder %s85, 0
    %s88 = sadd.s32 %s87, 1
    %s89 = scalar_select %p86, %s87, %s88
    %p92 = pneg %p86
    %p93 = scmp.eq.s32.totalorder %s9, 2
    %p94 = por %p92, %p93
    %p95 = scmp.ne.s32.totalorder %s87, %s90
    %p96 = scmp.eq.s32.totalorder %s9, 0
    %p97 = por %p95, %p96
    %p98 = scmp.ne.s32.totalorder %s87, %s90
    %p99 = scmp.eq.s32.totalorder %s14, 2
    %p100 = por %p98, %p99
    %p101 = scmp.ne.s32.totalorder %s90, %s91
    %p102 = scmp.eq.s32.totalorder %s14, 0
    %p103 = por %p101, %p102
    %p104 = scmp.ne.s32.totalorder %s90, %s91
    %p105 = scmp.eq.s32.totalorder %s15, 2
    %p106 = por %p104, %p105
    %p108 = scmp.ne.s32.totalorder %s91, %s107
    %p109 = scmp.eq.s32.totalorder %s15, 0
    %p110 = por %p108, %p109
    %s111 = ssub.s32 %s16, %s28
    %p112 = scmp.eq.s32.totalorder %s111, 0
    %s114 = sadd.s32 %s113, 1
    %s115 = scalar_select %p112, %s113, %s114
    %p118 = pneg %p112
    %p119 = scmp.eq.s32.totalorder %s9, 2
    %p120 = por %p118, %p119
    %p121 = scmp.ne.s32.totalorder %s113, %s116
    %p122 = scmp.eq.s32.totalorder %s9, 0
    %p123 = por %p121, %p122
    %p124 = scmp.ne.s32.totalorder %s113, %s116
    %p125 = scmp.eq.s32.totalorder %s14, 2
    %p126 = por %p124, %p125
    %p127 = scmp.ne.s32.totalorder %s116, %s117
    %p128 = scmp.eq.s32.totalorder %s14, 0
    %p129 = por %p127, %p128
    %p130 = scmp.ne.s32.totalorder %s116, %s117
    %p131 = scmp.eq.s32.totalorder %s15, 2
    %p132 = por %p130, %p131
    %p134 = scmp.ne.s32.totalorder %s117, %s133
    %p135 = scmp.eq.s32.totalorder %s15, 0
    %p136 = por %p134, %p135
    %p137 = scmp.le.s32.totalorder 1, %s9
    %p138 = scmp.lt.s32.totalorder %s9, 4
    %p139 = pnand %p137, %p138
    %p140 = pneg %p139
    // Predicated region
    $region9: #{yolo_loss.1} parent=5 // pred_check
      _
    $region10: #{yolo_loss.1} parent=5 // pred_check_branch
      %142 = sbr.rel (%p139) target = $region12
    $region11: #{yolo_loss.1} parent=5 // pred_region
      %s143 = ssub.s32 %s9, 1
    $region12: #{yolo_loss.1} parent=5 // pred_fallthru
      _
    %p144 = scmp.lt.s32.totalorder %s9, 3
    // Predicated region
    $region13: #{yolo_loss.1} parent=5 // pred_check
      %p145 = pneg %p144
    $region14: #{yolo_loss.1} parent=5 // pred_check_branch
      %147 = sbr.rel (%p145) target = $region16
    $region15: #{yolo_loss.1} parent=5 // pred_region
      // Predicated region
      $region17: #{yolo_loss.1} parent=15 // pred_check
        %p148 = pneg %p43
      $region18: #{yolo_loss.1} parent=15 // pred_check_branch
        %150 = sbr.rel (%p148) target = $region20
      $region19: #{yolo_loss.1} parent=15 // pred_region
        %p151 = scmp.lt.s32.totalorder %s16, 2
        %s152 = scalar_select %p151, %s16, 2
        %p153 = scmp.lt.s32.totalorder %s17, 0
        %s154 = scalar_select %p153, %s17, 0
        %s155 = smul.addr %s152, 13
        %s156 = sadd.s32 %s154, %s155
        %s157 = scalar_lea.vmem %s0, %s156
      $region20: #{yolo_loss.1} parent=15 // pred_fallthru
        _
      // Predicated region
      $region21: #{yolo_loss.1} parent=15 // pred_check
        %p158 = pneg %p71
      $region22: #{yolo_loss.1} parent=15 // pred_check_branch
        %160 = sbr.rel (%p158) target = $region24
      $region23: #{yolo_loss.1} parent=15 // pred_region
        %p161 = scmp.lt.s32.totalorder %s16, 2
        %s162 = scalar_select %p161, %s16, 2
        %p163 = scmp.lt.s32.totalorder %s17, 0
        %s164 = scalar_select %p163, %s17, 0
        %s165 = smul.addr %s162, 6
        %s166 = sadd.s32 %s164, %s165
        %s167 = scalar_lea.vmem %s1, %s166
      $region24: #{yolo_loss.1} parent=15 // pred_fallthru
        _
      // Predicated region
      $region25: #{yolo_loss.1} parent=15 // pred_check
        %p168 = pneg %p97
      $region26: #{yolo_loss.1} parent=15 // pred_check_branch
        %170 = sbr.rel (%p168) target = $region28
      $region27: #{yolo_loss.1} parent=15 // pred_region
        %p171 = scmp.lt.s32.totalorder %s16, 2
        %s172 = scalar_select %p171, %s16, 2
        %s173 = smul.addr %s172, 4
        %s174 = scalar_lea.vmem %s2, %s173
      $region28: #{yolo_loss.1} parent=15 // pred_fallthru
        _
    $region16: #{yolo_loss.1} parent=5 // pred_fallthru
      _
    %p175 = scmp.le.s32.totalorder 1, %s9
    %p176 = scmp.lt.s32.totalorder %s9, 4
    %p177 = pnand %p175, %p176
    %p178 = pneg %p177
    // Predicated region
    $region29: #{yolo_loss.1} parent=5 // pred_check
      _
    $region30: #{yolo_loss.1} parent=5 // pred_check_branch
      %180 = sbr.rel (%p177) target = $region32
    $region31: #{yolo_loss.1} parent=5 // pred_region
      %s181 = ssub.s32 %s9, 1
      %p182 = scmp.lt.s32.totalorder %s18, 2
      %s183 = scalar_select %p182, %s18, 2
      %p184 = scmp.lt.s32.totalorder %s19, 0
      %s185 = scalar_select %p184, %s19, 0
      %s186 = smul.addr %s183, 13
      %s187 = sadd.s32 %s185, %s186
      %s188 = scalar_lea.vmem %s0, %s187
      %p189 = pneg %p49
      %p190 = pneg %p46
      %p191 = scmp.lt.s32.totalorder %s18, 2
      %s192 = scalar_select %p191, %s18, 2
      %p193 = scmp.lt.s32.totalorder %s19, 0
      %s194 = scalar_select %p193, %s19, 0
      %s195 = smul.addr %s192, 6
      %s196 = sadd.s32 %s194, %s195
      %s197 = scalar_lea.vmem %s1, %s196
      %p198 = pneg %p77
      %p199 = pneg %p74
      %p200 = scmp.lt.s32.totalorder %s18, 2
      %s201 = scalar_select %p200, %s18, 2
      %s202 = smul.addr %s201, 4
      %s203 = scalar_lea.vmem %s2, %s202
      %p204 = pneg %p103
      %p205 = pneg %p100
      %p206 = pneg %p129
      %p207 = pneg %p126
      %p208 = scmp.lt.s32.totalorder %s18, 2
      %s209 = scalar_select %p208, %s18, 2
      %s210 = smul.addr %s209, 8
      %s211 = scalar_lea.vmem %s3, %s210
      %p212 = scmp.lt.s32.totalorder %s18, 2
      %s213 = scalar_select %p212, %s18, 2
      %p214 = scmp.lt.s32.totalorder %s19, 0
      %s215 = scalar_select %p214, %s19, 0
      %s216 = smul.addr %s213, 13
      %s217 = sadd.s32 %s215, %s216
      %s218 = scalar_lea.vmem %s0, %s217
      %p219 = scmp.lt.s32.totalorder %s18, 2
      %s220 = scalar_select %p219, %s18, 2
      %p221 = scmp.lt.s32.totalorder %s19, 0
      %s222 = scalar_select %p221, %s19, 0
      %s223 = smul.addr %s220, 6
      %s224 = sadd.s32 %s222, %s223
      %s225 = scalar_lea.vmem %s1, %s224
      %p226 = scmp.lt.s32.totalorder %s18, 2
      %s227 = scalar_select %p226, %s18, 2
      %s228 = smul.addr %s227, 4
      %s229 = scalar_lea.vmem %s2, %s228
      %p230 = scmp.lt.s32.totalorder %s18, 2
      %s231 = scalar_select %p230, %s18, 2
      %s232 = smul.addr %s231, 8
      %s233 = scalar_lea.vmem %s3, %s232
      %p234 = scmp.eq.s32.totalorder %s19, 0
      // Predicated region
      $region33: #{yolo_loss.1} parent=31 // pred_check
        %p235 = pneg %p234
      $region34: #{yolo_loss.1} parent=31 // pred_check_branch
        %237 = sbr.rel (%p235) target = $region36
      $region35: #{yolo_loss.1} parent=31 // pred_region
        %238 = vst [vmem:[#allocation2] sm:$0x1] 0.0
        %239 = vst [vmem:[#allocation3] sm:$0x1] 0.0
        %240 = vst [vmem:[#allocation4] sm:$0x1] 0.0
        %241 = vst [vmem:[#allocation5] sm:$0x1] 0.0
        %242 = vst [vmem:[#allocation6] sm:$0x1] 0.0
        %243 = vst [vmem:[#allocation7] sm:$0x1] 0.0
      $region36: #{yolo_loss.1} parent=31 // pred_fallthru
        _
      %v244 = vld [vmem:[%s225] sm:$0x1]
      %vm245 = vcmp.eq.f32.partialorder %v244, 1.0
      %v246 = vsel %vm245, 1, 0
      %v247 = vcvt.s32.f32 %v246
      %vm248 = vcmp.eq.f32.partialorder %v244, 0.0
      %v249 = vsel %vm248, 1, 0
      %v250 = vcvt.s32.f32 %v249
      %v251 = vld [vmem:[%s218] sm:$0x1]
      %v252 = vand.u32 2147483647, %v251
      %v253 = vsub.f32 0.0, %v252
      %v254 = vmul.f32 %v253, 1.442695
      %v255 = vpow.pop %v254
      %v256 = vmax.f32 %v251, 0.0
      %v257 = vadd.f32 %v255, 1.0
      %v258 = vlog2.pop %v257
      %v259 = vmul.f32 %v258, 0.6931472
      %v260 = vadd.f32 %v256, %v259
      %v261 = vld [vmem:[#allocation2] sm:$0x1]
      %v262 = vmul.f32 %v260, %v250
      %v263 = vadd.f32 %v261, %v262
      %264 = vst [vmem:[#allocation2] sm:$0x1] %v263
      %v265 = vld [vmem:[#allocation3] sm:$0x1]
      %v266 = vadd.f32 %v265, %v250
      %267 = vst [vmem:[#allocation3] sm:$0x1] %v266
      %v268 = vmul.f32 %v251, 0.5
      %v269 = vtanh.pop %v268
      %v270 = vmul.f32 %v269, 0.5
      %v271 = vadd.f32 %v270, 0.5
      %s272 = scalar_lea.vmem %s218, 1
      %v273 = vld [vmem:[%s272] sm:$0x1]
      %v274 = vmul.f32 %v273, 0.5
      %v275 = vtanh.pop %v274
      %v276 = vmul.f32 %v275, 0.5
      %v277 = vadd.f32 %v276, 0.5
      %s278 = scalar_lea.vmem %s218, 2
      %v279 = vld [vmem:[%s278] sm:$0x1]
      %v280 = vmul.f32 %v279, 0.5
      %v281 = vtanh.pop %v280
      %v282 = vmul.f32 %v281, 0.5
      %v283 = vadd.f32 %v282, 0.5
      %s284 = scalar_lea.vmem %s218, 3
      %v285 = vld [vmem:[%s284] sm:$0x1]
      %s286 = scalar_lea.vmem %s218, 4
      %v287 = vld [vmem:[%s286] sm:$0x1]
      %v288 = vld [vmem:[%s229] sm:$0x1]
      %v289 = vld [vmem:[%s229 + $0x1] sm:$0x1]
      %v290 = vld [vmem:[%s229 + $0x2] sm:$0x1]
      %v291 = vld [vmem:[%s229 + $0x3] sm:$0x1]
      %v292 = vmul.f32 %v285, 1.442695
      %v293 = vpow.pop %v292
      %v294 = vmul.f32 %v293, %v288
      %v295 = vmul.f32 %v287, 1.442695
      %v296 = vpow.pop %v295
      %v297 = vmul.f32 %v296, %v289
      %s298 = scalar_lea.vmem %s225, 1
      %v299 = vld [vmem:[%s298] sm:$0x1]
      %s300 = scalar_lea.vmem %s225, 2
      %v301 = vld [vmem:[%s300] sm:$0x1]
      %s302 = scalar_lea.vmem %s225, 3
      %v303 = vld [vmem:[%s302] sm:$0x1]
      %s304 = scalar_lea.vmem %s225, 4
      %v305 = vld [vmem:[%s304] sm:$0x1]
      %v306 = vmul.f32 %v294, 0.5
      %v307 = vadd.f32 %v277, %v306
      %v308 = vmul.f32 %v303, 0.5
      %v309 = vadd.f32 %v299, %v308
      %v310 = vmin.f32 %v307, %v309
      %v311 = vsub.f32 %v277, %v306
      %v312 = vsub.f32 %v299, %v308
      %v313 = vmax.f32 %v311, %v312
      %v314 = vsub.f32 %v310, %v313
      %v315 = vmax.f32 %v314, 0.0
      %v316 = vmul.f32 %v297, 0.5
      %v317 = vadd.f32 %v283, %v316
      %v318 = vmul.f32 %v305, 0.5
      %v319 = vadd.f32 %v301, %v318
      %v320 = vmin.f32 %v317, %v319
      %v321 = vsub.f32 %v283, %v316
      %v322 = vsub.f32 %v301, %v318
      %v323 = vmax.f32 %v321, %v322
      %v324 = vsub.f32 %v320, %v323
      %v325 = vmax.f32 %v324, 0.0
      %v326 = vmul.f32 %v315, %v325
      %v327 = vmul.f32 %v294, %v297
      %v328 = vand.u32 2147483647, %v327
      %v329 = vmul.f32 %v303, %v305
      %v330 = vand.u32 2147483647, %v329
      %v331 = vadd.f32 %v328, %v330
      %v332 = vsub.f32 %v331, %v326
      %v333 = vadd.f32 %v332, 1e-06
      %v334 = vrcp.pop %v333
      %v335 = vmul.f32 %v326, %v334
      %v336 = vmul.f32 %v335, %v244
      %v337 = vsub.f32 %v271, %v336
      %v338 = vmul.f32 %v337, %v337
      %v339 = vld [vmem:[#allocation4] sm:$0x1]
      %v340 = vmul.f32 %v338, %v247
      %v341 = vadd.f32 %v339, %v340
      %342 = vst [vmem:[#allocation4] sm:$0x1] %v341
      %v343 = vld [vmem:[#allocation5] sm:$0x1]
      %v344 = vadd.f32 %v343, %v247
      %345 = vst [vmem:[#allocation5] sm:$0x1] %v344
      %v346 = vmul.f32 %v303, %v290
      %v347 = vadd.f32 %v346, 1e-06
      %v348 = vlog2.pop %v347
      %v349 = vmul.f32 %v348, 0.6931472
      %v350 = vmul.f32 %v305, %v291
      %v351 = vadd.f32 %v350, 1e-06
      %v352 = vlog2.pop %v351
      %v353 = vmul.f32 %v352, 0.6931472
      %v354 = vsub.f32 %v277, %v299
      %v355 = vmul.f32 %v354, %v354
      %v356 = vsub.f32 %v283, %v301
      %v357 = vmul.f32 %v356, %v356
      %v358 = vadd.f32 %v355, %v357
      %v359 = vsub.f32 %v285, %v349
      %v360 = vmul.f32 %v359, %v359
      %v361 = vadd.f32 %v358, %v360
      %v362 = vsub.f32 %v287, %v353
      %v363 = vmul.f32 %v362, %v362
      %v364 = vadd.f32 %v361, %v363
      %v365 = vld [vmem:[#allocation6] sm:$0x1]
      %v366 = vmul.f32 %v364, %v247
      %v367 = vadd.f32 %v365, %v366
      %368 = vst [vmem:[#allocation6] sm:$0x1] %v367
      %s369 = scalar_lea.vmem %s218, 5
      %v370 = vld [vmem:[%s369] sm:$0x1]
      %s371 = scalar_lea.vmem %s218, 6
      %v372 = vld [vmem:[%s371] sm:$0x1]
      %s373 = scalar_lea.vmem %s218, 7
      %v374 = vld [vmem:[%s373] sm:$0x1]
      %s375 = scalar_lea.vmem %s218, 8
      %v376 = vld [vmem:[%s375] sm:$0x1]
      %s377 = scalar_lea.vmem %s218, 9
      %v378 = vld [vmem:[%s377] sm:$0x1]
      %s379 = scalar_lea.vmem %s218, 10
      %v380 = vld [vmem:[%s379] sm:$0x1]
      %s381 = scalar_lea.vmem %s218, 11
      %v382 = vld [vmem:[%s381] sm:$0x1]
      %s383 = scalar_lea.vmem %s218, 12
      %v384 = vld [vmem:[%s383] sm:$0x1]
      %v385 = vmax.f32 %v370, %v372
      %v386 = vmax.f32 %v385, %v374
      %v387 = vmax.f32 %v386, %v376
      %v388 = vmax.f32 %v387, %v378
      %v389 = vmax.f32 %v388, %v380
      %v390 = vmax.f32 %v389, %v382
      %v391 = vmax.f32 %v390, %v384
      %s392 = scalar_lea.vmem %s225, 5
      %v393 = vld [vmem:[%s392] sm:$0x1]
      %v394 = vsub.f32 %v370, %v391
      %v395 = vmul.f32 %v394, 1.442695
      %v396 = vpow.pop %v395
      %v397 = vadd.f32 %v396, 0.0
      %vm398 = vcmp.eq.f32.partialorder %v393, 0.0
      %v399 = vsel %vm398, %v370, 0.0
      %v400 = vadd.f32 %v399, 0.0
      %v401 = vsub.f32 %v372, %v391
      %v402 = vmul.f32 %v401, 1.442695
      %v403 = vpow.pop %v402
      %v404 = vadd.f32 %v397, %v403
      %vm405 = vcmp.eq.f32.partialorder %v393, 1.0
      %v406 = vsel %vm405, %v372, 0.0
      %v407 = vadd.f32 %v400, %v406
      %v408 = vsub.f32 %v374, %v391
      %v409 = vmul.f32 %v408, 1.442695
      %v410 = vpow.pop %v409
      %v411 = vadd.f32 %v404, %v410
      %vm412 = vcmp.eq.f32.partialorder %v393, 2.0
      %v413 = vsel %vm412, %v374, 0.0
      %v414 = vadd.f32 %v407, %v413
      %v415 = vsub.f32 %v376, %v391
      %v416 = vmul.f32 %v415, 1.442695
      %v417 = vpow.pop %v416
      %v418 = vadd.f32 %v411, %v417
      %vm419 = vcmp.eq.f32.partialorder %v393, 3.0
      %v420 = vsel %vm419, %v376, 0.0
      %v421 = vadd.f32 %v414, %v420
      %v422 = vsub.f32 %v378, %v391
      %v423 = vmul.f32 %v422, 1.442695
      %v424 = vpow.pop %v423
      %v425 = vadd.f32 %v418, %v424
      %vm426 = vcmp.eq.f32.partialorder %v393, 4.0
      %v427 = vsel %vm426, %v378, 0.0
      %v428 = vadd.f32 %v421, %v427
      %v429 = vsub.f32 %v380, %v391
      %v430 = vmul.f32 %v429, 1.442695
      %v431 = vpow.pop %v430
      %v432 = vadd.f32 %v425, %v431
      %vm433 = vcmp.eq.f32.partialorder %v393, 5.0
      %v434 = vsel %vm433, %v380, 0.0
      %v435 = vadd.f32 %v428, %v434
      %v436 = vsub.f32 %v382, %v391
      %v437 = vmul.f32 %v436, 1.442695
      %v438 = vpow.pop %v437
      %v439 = vadd.f32 %v432, %v438
      %vm440 = vcmp.eq.f32.partialorder %v393, 6.0
      %v441 = vsel %vm440, %v382, 0.0
      %v442 = vadd.f32 %v435, %v441
      %v443 = vsub.f32 %v384, %v391
      %v444 = vmul.f32 %v443, 1.442695
      %v445 = vpow.pop %v444
      %v446 = vadd.f32 %v439, %v445
      %vm447 = vcmp.eq.f32.partialorder %v393, 7.0
      %v448 = vsel %vm447, %v384, 0.0
      %v449 = vadd.f32 %v442, %v448
      %v450 = vlog2.pop %v446
      %v451 = vmul.f32 %v450, 0.6931472
      %v452 = vadd.f32 %v391, %v451
      %v453 = vsub.f32 %v452, %v449
      %v454 = vld [vmem:[#allocation7] sm:$0x1]
      %v455 = vmul.f32 %v453, %v247
      %v456 = vadd.f32 %v454, %v455
      %457 = vst [vmem:[#allocation7] sm:$0x1] %v456
      // Predicated region
      $region37: #{yolo_loss.1} parent=31 // pred_check
        %p458 = pneg %p234
      $region38: #{yolo_loss.1} parent=31 // pred_check_branch
        %460 = sbr.rel (%p458) target = $region40
      $region39: #{yolo_loss.1} parent=31 // pred_region
        %v461 = vld [vmem:[#allocation2] sm:$0x1]
        %v462 = vadd.f32 %v461, 0.0
        %463 = vst [vmem:[%s233] sm:$0x1] %v462
        %v464 = vld [vmem:[#allocation3] sm:$0x1]
        %v465 = vadd.f32 %v464, 0.0
        %466 = vst [vmem:[%s233 + $0x1] sm:$0x1] %v465
        %v467 = vld [vmem:[#allocation4] sm:$0x1]
        %v468 = vadd.f32 %v467, 0.0
        %469 = vst [vmem:[%s233 + $0x2] sm:$0x1] %v468
        %v470 = vld [vmem:[#allocation5] sm:$0x1]
        %v471 = vadd.f32 %v470, 0.0
        %472 = vst [vmem:[%s233 + $0x3] sm:$0x1] %v471
        %v473 = vld [vmem:[#allocation6] sm:$0x1]
        %v474 = vadd.f32 %v473, 0.0
        %475 = vst [vmem:[%s233 + $0x4] sm:$0x1] %v474
        %v476 = vld [vmem:[#allocation7] sm:$0x1]
        %v477 = vadd.f32 %v476, 0.0
        %478 = vst [vmem:[%s233 + $0x5] sm:$0x1] %v477
      $region40: #{yolo_loss.1} parent=31 // pred_fallthru
        _
      %p479 = scmp.lt.s32.totalorder %s18, 2
      %s480 = scalar_select %p479, %s18, 2
      %s481 = smul.addr %s480, 8
      %s482 = scalar_lea.vmem %s3, %s481
      // Predicated region
      $region41: #{yolo_loss.1} parent=31 // pred_check
        %p483 = pneg %p126
      $region42: #{yolo_loss.1} parent=31 // pred_check_branch
        %485 = sbr.rel (%p483) target = $region44
      $region43: #{yolo_loss.1} parent=31 // pred_region
        _
      $region44: #{yolo_loss.1} parent=31 // pred_fallthru
        _
    $region32: #{yolo_loss.1} parent=5 // pred_fallthru
      _
    %p486 = scmp.le.s32.totalorder 2, %s9
    // Predicated region
    $region45: #{yolo_loss.1} parent=5 // pred_check
      %p487 = pneg %p486
    $region46: #{yolo_loss.1} parent=5 // pred_check_branch
      %489 = sbr.rel (%p487) target = $region48
    $region47: #{yolo_loss.1} parent=5 // pred_region
      %s490 = ssub.s32 %s9, 2
      // Predicated region
      $region49: #{yolo_loss.1} parent=47 // pred_check
        %p491 = pneg %p132
      $region50: #{yolo_loss.1} parent=47 // pred_check_branch
        %493 = sbr.rel (%p491) target = $region52
      $region51: #{yolo_loss.1} parent=47 // pred_region
        %p494 = scmp.lt.s32.totalorder %s20, 2
        %s495 = scalar_select %p494, %s20, 2
        %s496 = smul.addr %s495, 8
        %s497 = scalar_lea.vmem %s3, %s496
      $region52: #{yolo_loss.1} parent=47 // pred_fallthru
        _
    $region48: #{yolo_loss.1} parent=5 // pred_fallthru
      _
  $region6: #{yolo_loss.1} parent=0 // loop_footer
    %s13 = sadd.s32 1, %s9
  $region7: #{yolo_loss.1} parent=0 // loop_footer_branch
    %8 = sbr.rel target = $region3
  $region8: #{yolo_loss.1} parent=0 // loop_exit
    _

</llo_original>
